<compile_context>
chip_gen: v7x
topology: tpu7x:2x2x1
jax: 0.10.0
libtpu: 0.0.40
codegen_flags: <defaults>
</compile_context>

<pallas_src>
import functools
import math

import jax
import jax.numpy as jnp
from jax import lax
from jax.experimental import pallas as pl
from jax.experimental.pallas import tpu as pltpu


# ---------------------------------------------------------------------------
# Pallas kernel
# ---------------------------------------------------------------------------
def rnn_seq_kernel(
    x_ref,          # (T*B, S)   time-major encoder input, pre-flattened
    w_ih_enc_ref,   # (S, H)     encoder input->hidden weight (pre-transposed)
    w_hh_enc_ref,   # (H, H)     encoder hidden->hidden weight (pre-transposed)
    b_enc_ref,      # (1, H)     encoder bias (b_ih + b_hh)
    w_ih_dec_ref,   # (H, H)     decoder input->hidden weight (pre-transposed)
    w_hh_dec_ref,   # (H, H)     decoder hidden->hidden weight (pre-transposed)
    b_dec_ref,      # (1, H)     decoder bias (b_ih + b_hh)
    w_fc_ref,       # (H, S)     out_fc weight (pre-transposed)
    b_fc_ref,       # (1, S)     out_fc bias
    out_ref,        # (F*B, S)   time-major decoder predictions, flattened
    hs_ref,         # scratch (F*B, H) f32 -- decoder hidden states
    *,
    T, B, F,
):
    H = w_hh_enc_ref.shape[0]

    # ---- hoisted weight / bias loads (stay in vregs across the loops) ----
    w_hh_enc = w_hh_enc_ref[...]
    w_ih_dec = w_ih_dec_ref[...]
    w_hh_dec = w_hh_dec_ref[...]
    b_dec = jnp.broadcast_to(b_dec_ref[...], (B, H))   # broadcast once, not per step

    # ---- encoder input projection: one matmul for all T steps, kept in registers ----
    xg = (
        jnp.dot(x_ref[...], w_ih_enc_ref[...], preferred_element_type=jnp.float32)
        + b_enc_ref[...]
    )                                                   # (T*B, H)

    # ---- encoder recurrence: h_t = tanh(xg[t] + h_{t-1} @ W_hh) ----
    # Step 0: h_{-1} == 0 -> no W_hh matmul at all.
    h = jnp.tanh(xg[0:B, :])
    for t in range(1, T):                               # fully unrolled, static slices
        h = jnp.tanh(
            xg[t * B:(t + 1) * B, :]
            + jnp.dot(h, w_hh_enc, preferred_element_type=jnp.float32)
        )
    hn = h                                              # (B, H)

    # ---- decoder ----
    # dec_input = cat([hn, zeros(F-1, B, H)]); zero initial hidden state.
    # Step 0: prev hidden == 0 -> h_0 = tanh(hn @ W_ih_dec + b_dec)
    h = jnp.tanh(jnp.dot(hn, w_ih_dec, preferred_element_type=jnp.float32) + b_dec)
    hs_ref[0:B, :] = h
    # Steps 1..F-1: input == 0 -> h_t = tanh(h_{t-1} @ W_hh_dec + b_dec)
    for t in range(1, F):
        h = jnp.tanh(jnp.dot(h, w_hh_dec, preferred_element_type=jnp.float32) + b_dec)
        hs_ref[t * B:(t + 1) * B, :] = h

    # ---- out_fc: one batched matmul + one contiguous store ----
    out_ref[...] = (
        jnp.dot(hs_ref[...], w_fc_ref[...], preferred_element_type=jnp.float32)
        + b_fc_ref[...]
    )


# ---------------------------------------------------------------------------
# Wrapper
# ---------------------------------------------------------------------------
def rnn_seq_predict(x, params, future_len):
    """x: (B, T, sensor_num) float32 -> (B, future_len, sensor_num) float32."""
    B, T, S = x.shape
    H = params["w_hh_enc"].shape[0]  # PyTorch layout (H, H)
    F = future_len

    # Time-major + flatten in the wrapper (layout plumbing is free relative to the call).
    x_flat = jnp.transpose(x, (1, 0, 2)).reshape(T * B, S).astype(jnp.float32)

    # Pre-transpose weights for right-multiplication inside the kernel.
    w_ih_enc = params["w_ih_enc"].T                     # (S, H)
    w_hh_enc = params["w_hh_enc"].T                     # (H, H)
    b_enc = (params["b_ih_enc"] + params["b_hh_enc"]).reshape(1, H)
    w_ih_dec = params["w_ih_dec"].T                     # (H, H)
    w_hh_dec = params["w_hh_dec"].T                     # (H, H)
    b_dec = (params["b_ih_dec"] + params["b_hh_dec"]).reshape(1, H)
    w_fc = params["w_fc"].T                             # (H, S)
    b_fc = params["b_fc"].reshape(1, S)

    # Advisory cost estimate for XLA scheduling around the custom call.
    flops = (
        2 * T * B * S * H              # encoder input projection (hoisted)
        + 2 * (T - 1) * B * H * H      # encoder recurrence (step 0 has no W_hh matmul)
        + 2 * B * H * H                # decoder step-0 input projection
        + 2 * (F - 1) * B * H * H      # decoder recurrence
        + 2 * F * B * H * S            # out_fc
    )
    transcendentals = (T + F) * B * H
    bytes_accessed = 4 * (
        T * B * S + F * B * S          # x, out
        + S * H + 3 * H * H            # weights
        + 2 * H + H * S + S            # biases + fc
    )

    vmem = pl.BlockSpec(memory_space=pltpu.MemorySpace.VMEM)
    out_flat = pl.pallas_call(
        functools.partial(rnn_seq_kernel, T=T, B=B, F=F),
        out_shape=jax.ShapeDtypeStruct((F * B, S), jnp.float32),
        in_specs=[vmem] * 9,
        out_specs=vmem,
        scratch_shapes=[
            pltpu.VMEM((F * B, H), jnp.float32),   # decoder hidden-state slab
        ],
        compiler_params=pltpu.CompilerParams(
            vmem_limit_bytes=32 * 1024 * 1024,     # safe on v5e/v6e/v7x at these sizes
        ),
        cost_estimate=pl.CostEstimate(
            flops=int(flops),
            transcendentals=int(transcendentals),
            bytes_accessed=int(bytes_accessed),
        ),
    )(x_flat, w_ih_enc, w_hh_enc, b_enc, w_ih_dec, w_hh_dec, b_dec, w_fc, b_fc)

    # (F*B, S) -> (F, B, S) -> (B, F, S) in the wrapper (no in-kernel reshapes).
    return jnp.transpose(out_flat.reshape(F, B, S), (1, 0, 2))


# ---------------------------------------------------------------------------
# Deterministic parameter init (PyTorch-like uniform(-1/sqrt(H), 1/sqrt(H)))
# ---------------------------------------------------------------------------
def init_params(key, sensor_num, hidden_size):
    k = 1.0 / math.sqrt(hidden_size)
    keys = jax.random.split(key, 10)

    def u(kk, shape):
        return jax.random.uniform(kk, shape, jnp.float32, minval=-k, maxval=k)

    H, S = hidden_size, sensor_num
    return {
        # encoder RNN (PyTorch layout)
        "w_ih_enc": u(keys[0], (H, S)),
        "w_hh_enc": u(keys[1], (H, H)),
        "b_ih_enc": u(keys[2], (H,)),
        "b_hh_enc": u(keys[3], (H,)),
        # decoder RNN
        "w_ih_dec": u(keys[4], (H, H)),
        "w_hh_dec": u(keys[5], (H, H)),
        "b_ih_dec": u(keys[6], (H,)),
        "b_hh_dec": u(keys[7], (H,)),
        # out_fc
        "w_fc": u(keys[8], (S, H)),
        "b_fc": u(keys[9], (S,)),
    }


# ---------------------------------------------------------------------------
# Pure-JAX reference (mirrors torch.nn.RNN (tanh) / Linear semantics)
# ---------------------------------------------------------------------------
def _rnn_ref(xs, w_ih, w_hh, b_ih, b_hh):
    T, B, _ = xs.shape
    H = w_hh.shape[1]

    def step(h, x_t):
        h_new = jnp.tanh(x_t @ w_ih.T + b_ih + h @ w_hh.T + b_hh)
        return h_new, h_new

    h0 = jnp.zeros((B, H), jnp.float32)
    hT, hs = lax.scan(step, h0, xs)
    return hs, hT


def reference_forward(x, params, future_len):
    B = x.shape[0]
    H = params["w_hh_enc"].shape[0]
    xs = jnp.transpose(x, (1, 0, 2))  # (T, B, S)
    _, hn = _rnn_ref(xs, params["w_ih_enc"], params["w_hh_enc"],
                     params["b_ih_enc"], params["b_hh_enc"])
    dec_in = jnp.concatenate(
        [hn[None], jnp.zeros((future_len - 1, B, H), jnp.float32)], axis=0)
    dec_out, _ = _rnn_ref(dec_in, params["w_ih_dec"], params["w_hh_dec"],
                          params["b_ih_dec"], params["b_hh_dec"])
    dec_out = jnp.transpose(dec_out, (1, 0, 2))  # (B, F, H)
    return dec_out @ params["w_fc"].T + params["b_fc"]


# ---------------------------------------------------------------------------
if __name__ == "__main__":
    B, T, SENSOR, HIDDEN, FUTURE = 2, 8, 4, 32, 6

    key = jax.random.PRNGKey(0)
    kx, kp = jax.random.split(key)
    x = jax.random.normal(kx, (B, T, SENSOR), jnp.float32)
    params = init_params(kp, SENSOR, HIDDEN)

    y = rnn_seq_predict(x, params, FUTURE)
    y = jax.block_until_ready(y)

    y_ref = reference_forward(x, params, FUTURE)
    assert y.shape == (B, FUTURE, SENSOR), y.shape
    assert jnp.allclose(y, y_ref, atol=1e-5, rtol=1e-5), (
        float(jnp.max(jnp.abs(y - y_ref))))

    print("KERNEL_OK")
</pallas_src>

<mosaic_0001>
module attributes {stable_mosaic.version = 11 : i64} {
  func.func @rnn_seq_kernel(%arg0: memref<16x4xf32, #tpu.memory_space<vmem>>, %arg1: memref<4x32xf32, #tpu.memory_space<vmem>>, %arg2: memref<32x32xf32, #tpu.memory_space<vmem>>, %arg3: memref<1x32xf32, #tpu.memory_space<vmem>>, %arg4: memref<32x32xf32, #tpu.memory_space<vmem>>, %arg5: memref<32x32xf32, #tpu.memory_space<vmem>>, %arg6: memref<1x32xf32, #tpu.memory_space<vmem>>, %arg7: memref<32x4xf32, #tpu.memory_space<vmem>>, %arg8: memref<1x4xf32, #tpu.memory_space<vmem>>, %arg9: memref<12x4xf32, #tpu.memory_space<vmem>>, %arg10: memref<12x32xf32, #tpu.memory_space<vmem>>) attributes {dimension_semantics = [], scalar_prefetch = 0 : i64, scratch_operands = 1 : i64, tpu.core_type = #tpu.core_type<tc>} {
    %c0 = arith.constant 0 : index
    %c0_0 = arith.constant 0 : index
    %0 = vector.load %arg2[%c0, %c0_0] : memref<32x32xf32, #tpu.memory_space<vmem>>, vector<32x32xf32>
    %c0_1 = arith.constant 0 : index
    %c0_2 = arith.constant 0 : index
    %1 = vector.load %arg4[%c0_1, %c0_2] : memref<32x32xf32, #tpu.memory_space<vmem>>, vector<32x32xf32>
    %c0_3 = arith.constant 0 : index
    %c0_4 = arith.constant 0 : index
    %2 = vector.load %arg5[%c0_3, %c0_4] : memref<32x32xf32, #tpu.memory_space<vmem>>, vector<32x32xf32>
    %c0_5 = arith.constant 0 : index
    %c0_6 = arith.constant 0 : index
    %3 = vector.load %arg6[%c0_5, %c0_6] : memref<1x32xf32, #tpu.memory_space<vmem>>, vector<1x32xf32>
    %4 = vector.shape_cast %3 : vector<1x32xf32> to vector<1x32xf32>
    %5 = vector.broadcast %4 : vector<1x32xf32> to vector<2x32xf32>
    %c0_7 = arith.constant 0 : index
    %c0_8 = arith.constant 0 : index
    %6 = vector.load %arg0[%c0_7, %c0_8] : memref<16x4xf32, #tpu.memory_space<vmem>>, vector<16x4xf32>
    %c0_9 = arith.constant 0 : index
    %c0_10 = arith.constant 0 : index
    %7 = vector.load %arg1[%c0_9, %c0_10] : memref<4x32xf32, #tpu.memory_space<vmem>>, vector<4x32xf32>
    %cst = arith.constant dense<0.000000e+00> : vector<16x32xf32>
    %8 = tpu.matmul %6, %7, %cst {dimension_numbers = #tpu.dot_dimension_numbers<[1], [0], [0], [1], [0, 0, 1, 1], [], []>} : vector<16x4xf32>, vector<4x32xf32>, vector<16x32xf32> -> vector<16x32xf32>
    %c0_11 = arith.constant 0 : index
    %c0_12 = arith.constant 0 : index
    %9 = vector.load %arg3[%c0_11, %c0_12] : memref<1x32xf32, #tpu.memory_space<vmem>>, vector<1x32xf32>
    %10 = vector.broadcast %9 : vector<1x32xf32> to vector<16x32xf32>
    %11 = arith.addf %8, %10 : vector<16x32xf32>
    %12 = vector.extract_strided_slice %11 {offsets = [0, 0], sizes = [2, 32], strides = [1, 1]} : vector<16x32xf32> to vector<2x32xf32>
    %13 = math.tanh %12 : vector<2x32xf32>
    %14 = vector.extract_strided_slice %11 {offsets = [2, 0], sizes = [2, 32], strides = [1, 1]} : vector<16x32xf32> to vector<2x32xf32>
    %cst_13 = arith.constant dense<0.000000e+00> : vector<2x32xf32>
    %15 = tpu.matmul %13, %0, %cst_13 {dimension_numbers = #tpu.dot_dimension_numbers<[1], [0], [0], [1], [0, 0, 1, 1], [], []>} : vector<2x32xf32>, vector<32x32xf32>, vector<2x32xf32> -> vector<2x32xf32>
    %16 = arith.addf %14, %15 : vector<2x32xf32>
    %17 = math.tanh %16 : vector<2x32xf32>
    %18 = vector.extract_strided_slice %11 {offsets = [4, 0], sizes = [2, 32], strides = [1, 1]} : vector<16x32xf32> to vector<2x32xf32>
    %cst_14 = arith.constant dense<0.000000e+00> : vector<2x32xf32>
    %19 = tpu.matmul %17, %0, %cst_14 {dimension_numbers = #tpu.dot_dimension_numbers<[1], [0], [0], [1], [0, 0, 1, 1], [], []>} : vector<2x32xf32>, vector<32x32xf32>, vector<2x32xf32> -> vector<2x32xf32>
    %20 = arith.addf %18, %19 : vector<2x32xf32>
    %21 = math.tanh %20 : vector<2x32xf32>
    %22 = vector.extract_strided_slice %11 {offsets = [6, 0], sizes = [2, 32], strides = [1, 1]} : vector<16x32xf32> to vector<2x32xf32>
    %cst_15 = arith.constant dense<0.000000e+00> : vector<2x32xf32>
    %23 = tpu.matmul %21, %0, %cst_15 {dimension_numbers = #tpu.dot_dimension_numbers<[1], [0], [0], [1], [0, 0, 1, 1], [], []>} : vector<2x32xf32>, vector<32x32xf32>, vector<2x32xf32> -> vector<2x32xf32>
    %24 = arith.addf %22, %23 : vector<2x32xf32>
    %25 = math.tanh %24 : vector<2x32xf32>
    %26 = vector.extract_strided_slice %11 {offsets = [8, 0], sizes = [2, 32], strides = [1, 1]} : vector<16x32xf32> to vector<2x32xf32>
    %cst_16 = arith.constant dense<0.000000e+00> : vector<2x32xf32>
    %27 = tpu.matmul %25, %0, %cst_16 {dimension_numbers = #tpu.dot_dimension_numbers<[1], [0], [0], [1], [0, 0, 1, 1], [], []>} : vector<2x32xf32>, vector<32x32xf32>, vector<2x32xf32> -> vector<2x32xf32>
    %28 = arith.addf %26, %27 : vector<2x32xf32>
    %29 = math.tanh %28 : vector<2x32xf32>
    %30 = vector.extract_strided_slice %11 {offsets = [10, 0], sizes = [2, 32], strides = [1, 1]} : vector<16x32xf32> to vector<2x32xf32>
    %cst_17 = arith.constant dense<0.000000e+00> : vector<2x32xf32>
    %31 = tpu.matmul %29, %0, %cst_17 {dimension_numbers = #tpu.dot_dimension_numbers<[1], [0], [0], [1], [0, 0, 1, 1], [], []>} : vector<2x32xf32>, vector<32x32xf32>, vector<2x32xf32> -> vector<2x32xf32>
    %32 = arith.addf %30, %31 : vector<2x32xf32>
    %33 = math.tanh %32 : vector<2x32xf32>
    %34 = vector.extract_strided_slice %11 {offsets = [12, 0], sizes = [2, 32], strides = [1, 1]} : vector<16x32xf32> to vector<2x32xf32>
    %cst_18 = arith.constant dense<0.000000e+00> : vector<2x32xf32>
    %35 = tpu.matmul %33, %0, %cst_18 {dimension_numbers = #tpu.dot_dimension_numbers<[1], [0], [0], [1], [0, 0, 1, 1], [], []>} : vector<2x32xf32>, vector<32x32xf32>, vector<2x32xf32> -> vector<2x32xf32>
    %36 = arith.addf %34, %35 : vector<2x32xf32>
    %37 = math.tanh %36 : vector<2x32xf32>
    %38 = vector.extract_strided_slice %11 {offsets = [14, 0], sizes = [2, 32], strides = [1, 1]} : vector<16x32xf32> to vector<2x32xf32>
    %cst_19 = arith.constant dense<0.000000e+00> : vector<2x32xf32>
    %39 = tpu.matmul %37, %0, %cst_19 {dimension_numbers = #tpu.dot_dimension_numbers<[1], [0], [0], [1], [0, 0, 1, 1], [], []>} : vector<2x32xf32>, vector<32x32xf32>, vector<2x32xf32> -> vector<2x32xf32>
    %40 = arith.addf %38, %39 : vector<2x32xf32>
    %41 = math.tanh %40 : vector<2x32xf32>
    %cst_20 = arith.constant dense<0.000000e+00> : vector<2x32xf32>
    %42 = tpu.matmul %41, %1, %cst_20 {dimension_numbers = #tpu.dot_dimension_numbers<[1], [0], [0], [1], [0, 0, 1, 1], [], []>} : vector<2x32xf32>, vector<32x32xf32>, vector<2x32xf32> -> vector<2x32xf32>
    %43 = arith.addf %42, %5 : vector<2x32xf32>
    %44 = math.tanh %43 : vector<2x32xf32>
    %c0_21 = arith.constant 0 : index
    %c0_22 = arith.constant 0 : index
    %45 = vector.load %arg10[%c0_21, %c0_22] : memref<12x32xf32, #tpu.memory_space<vmem>>, vector<2x32xf32>
    tpu.vector_store %arg10[%c0_21, %c0_22], %44 {strides = array<i32>} : memref<12x32xf32, #tpu.memory_space<vmem>>, vector<2x32xf32>,
    %cst_23 = arith.constant dense<0.000000e+00> : vector<2x32xf32>
    %46 = tpu.matmul %44, %2, %cst_23 {dimension_numbers = #tpu.dot_dimension_numbers<[1], [0], [0], [1], [0, 0, 1, 1], [], []>} : vector<2x32xf32>, vector<32x32xf32>, vector<2x32xf32> -> vector<2x32xf32>
    %47 = arith.addf %46, %5 : vector<2x32xf32>
    %48 = math.tanh %47 : vector<2x32xf32>
    %c2 = arith.constant 2 : index
    %c0_24 = arith.constant 0 : index
    %49 = vector.load %arg10[%c2, %c0_24] : memref<12x32xf32, #tpu.memory_space<vmem>>, vector<2x32xf32>
    tpu.vector_store %arg10[%c2, %c0_24], %48 {strides = array<i32>} : memref<12x32xf32, #tpu.memory_space<vmem>>, vector<2x32xf32>,
    %cst_25 = arith.constant dense<0.000000e+00> : vector<2x32xf32>
    %50 = tpu.matmul %48, %2, %cst_25 {dimension_numbers = #tpu.dot_dimension_numbers<[1], [0], [0], [1], [0, 0, 1, 1], [], []>} : vector<2x32xf32>, vector<32x32xf32>, vector<2x32xf32> -> vector<2x32xf32>
    %51 = arith.addf %50, %5 : vector<2x32xf32>
    %52 = math.tanh %51 : vector<2x32xf32>
    %c4 = arith.constant 4 : index
    %c0_26 = arith.constant 0 : index
    %53 = vector.load %arg10[%c4, %c0_26] : memref<12x32xf32, #tpu.memory_space<vmem>>, vector<2x32xf32>
    tpu.vector_store %arg10[%c4, %c0_26], %52 {strides = array<i32>} : memref<12x32xf32, #tpu.memory_space<vmem>>, vector<2x32xf32>,
    %cst_27 = arith.constant dense<0.000000e+00> : vector<2x32xf32>
    %54 = tpu.matmul %52, %2, %cst_27 {dimension_numbers = #tpu.dot_dimension_numbers<[1], [0], [0], [1], [0, 0, 1, 1], [], []>} : vector<2x32xf32>, vector<32x32xf32>, vector<2x32xf32> -> vector<2x32xf32>
    %55 = arith.addf %54, %5 : vector<2x32xf32>
    %56 = math.tanh %55 : vector<2x32xf32>
    %c6 = arith.constant 6 : index
    %c0_28 = arith.constant 0 : index
    %57 = vector.load %arg10[%c6, %c0_28] : memref<12x32xf32, #tpu.memory_space<vmem>>, vector<2x32xf32>
    tpu.vector_store %arg10[%c6, %c0_28], %56 {strides = array<i32>} : memref<12x32xf32, #tpu.memory_space<vmem>>, vector<2x32xf32>,
    %cst_29 = arith.constant dense<0.000000e+00> : vector<2x32xf32>
    %58 = tpu.matmul %56, %2, %cst_29 {dimension_numbers = #tpu.dot_dimension_numbers<[1], [0], [0], [1], [0, 0, 1, 1], [], []>} : vector<2x32xf32>, vector<32x32xf32>, vector<2x32xf32> -> vector<2x32xf32>
    %59 = arith.addf %58, %5 : vector<2x32xf32>
    %60 = math.tanh %59 : vector<2x32xf32>
    %c8 = arith.constant 8 : index
    %c0_30 = arith.constant 0 : index
    %61 = vector.load %arg10[%c8, %c0_30] : memref<12x32xf32, #tpu.memory_space<vmem>>, vector<2x32xf32>
    tpu.vector_store %arg10[%c8, %c0_30], %60 {strides = array<i32>} : memref<12x32xf32, #tpu.memory_space<vmem>>, vector<2x32xf32>,
    %cst_31 = arith.constant dense<0.000000e+00> : vector<2x32xf32>
    %62 = tpu.matmul %60, %2, %cst_31 {dimension_numbers = #tpu.dot_dimension_numbers<[1], [0], [0], [1], [0, 0, 1, 1], [], []>} : vector<2x32xf32>, vector<32x32xf32>, vector<2x32xf32> -> vector<2x32xf32>
    %63 = arith.addf %62, %5 : vector<2x32xf32>
    %64 = math.tanh %63 : vector<2x32xf32>
    %c10 = arith.constant 10 : index
    %c0_32 = arith.constant 0 : index
    %65 = vector.load %arg10[%c10, %c0_32] : memref<12x32xf32, #tpu.memory_space<vmem>>, vector<2x32xf32>
    tpu.vector_store %arg10[%c10, %c0_32], %64 {strides = array<i32>} : memref<12x32xf32, #tpu.memory_space<vmem>>, vector<2x32xf32>,
    %c0_33 = arith.constant 0 : index
    %c0_34 = arith.constant 0 : index
    %66 = vector.load %arg10[%c0_33, %c0_34] : memref<12x32xf32, #tpu.memory_space<vmem>>, vector<12x32xf32>
    %c0_35 = arith.constant 0 : index
    %c0_36 = arith.constant 0 : index
    %67 = vector.load %arg7[%c0_35, %c0_36] : memref<32x4xf32, #tpu.memory_space<vmem>>, vector<32x4xf32>
    %cst_37 = arith.constant dense<0.000000e+00> : vector<12x4xf32>
    %68 = tpu.matmul %66, %67, %cst_37 {dimension_numbers = #tpu.dot_dimension_numbers<[1], [0], [0], [1], [0, 0, 1, 1], [], []>} : vector<12x32xf32>, vector<32x4xf32>, vector<12x4xf32> -> vector<12x4xf32>
    %c0_38 = arith.constant 0 : index
    %c0_39 = arith.constant 0 : index
    %69 = vector.load %arg8[%c0_38, %c0_39] : memref<1x4xf32, #tpu.memory_space<vmem>>, vector<1x4xf32>
    %70 = vector.broadcast %69 : vector<1x4xf32> to vector<12x4xf32>
    %71 = arith.addf %68, %70 : vector<12x4xf32>
    %c0_40 = arith.constant 0 : index
    %c0_41 = arith.constant 0 : index
    %72 = vector.load %arg9[%c0_40, %c0_41] : memref<12x4xf32, #tpu.memory_space<vmem>>, vector<12x4xf32>
    tpu.vector_store %arg9[%c0_40, %c0_41], %71 {strides = array<i32>} : memref<12x4xf32, #tpu.memory_space<vmem>>, vector<12x4xf32>,
    return
  }
}

</mosaic_0001>

<llo_original>
// kernel: tpu_custom_call.1
$region0: #{tpu_custom_call.1}
  #allocation0 [shape = 'u32[]', space=smem, size = 0x4, offset = 0x4, fixed_abs, tag = 'smem constant byte address 0x4 - core index']
  #allocation1 [shape = 'u32[144,128]{1,0:T(1,128)}', space=vmem, size = 0x12000, scoped, tag = 'internal scratch']
  #allocation2 [shape = 'f32[12,32]{1,0:T(8,128)}', space=vmem, size = 0x2000, scoped, tag = 'scratch operand']
  %s0 = inlined_call_operand.vmem [shape: f32[16,4], index: 0, kind: input, shape index: {}]
  %s1 = inlined_call_operand.hbm [shape: f32[4,32], index: 1, kind: input, shape index: {}]
  %s2 = inlined_call_operand.vmem [shape: f32[32,32], index: 2, kind: input, shape index: {}]
  %s3 = inlined_call_operand.vmem [shape: f32[1,32], index: 3, kind: input, shape index: {}]
  %s4 = inlined_call_operand.vmem [shape: f32[32,32], index: 4, kind: input, shape index: {}]
  %s5 = inlined_call_operand.hbm [shape: f32[32,32], index: 5, kind: input, shape index: {}]
  %s6 = inlined_call_operand.vmem [shape: f32[1,32], index: 6, kind: input, shape index: {}]
  %s7 = inlined_call_operand.vmem [shape: f32[32,4], index: 7, kind: input, shape index: {}]
  %s8 = inlined_call_operand.vmem [shape: f32[1,4], index: 8, kind: input, shape index: {}]
  %s9 = inlined_call_operand.vmem [shape: f32[12,4], index: 9, kind: output, shape index: {}]
  %s10 = sld [smem:[#allocation0]]
  $region54: #{tpu_custom_call.1} parent=0
    _
  %s12 = ssub.s32 1, %s10
  %s13 = scalar_select 0, %s12, %s10
  $region1: #{tpu_custom_call.1} parent=0
    #allocation3 [shape = 'u8[2048]{0}', space=vmem, size = 0x800, scoped, tag = 'input window, operand 1, single buffered']
    #allocation4 [shape = 's32[1]{0}', space=sflag, size = 0x4, scoped, tag = 'scoped memory for tpu_custom_call.1']
    #allocation5 [shape = 'u8[16384]{0}', space=vmem, size = 0x4000, scoped, tag = 'input window, operand 5, single buffered']
    #allocation6 [shape = 's32[1]{0}', space=sflag, size = 0x4, scoped, tag = 'scoped memory for tpu_custom_call.1']
    %14 = vsyncpa [#allocation4], 0
    %15 = vsyncpa [#allocation6], 0
    // Predicated region
    $region2: #{tpu_custom_call.1} parent=1 // pred_check
      _
    $region3: #{tpu_custom_call.1} parent=1 // pred_check_branch
      %17 = sbr.rel (0) target = $region5
    $region4: #{tpu_custom_call.1} parent=1 // pred_region
      _
    $region5: #{tpu_custom_call.1} parent=1 // pred_fallthru
      _
    // Predicated region
    $region6: #{tpu_custom_call.1} parent=1 // pred_check
      _
    $region7: #{tpu_custom_call.1} parent=1 // pred_check_branch
      %19 = sbr.rel (0) target = $region9
    $region8: #{tpu_custom_call.1} parent=1 // pred_region
      %s21 = ssub.s32 64, 64
      %22 = vsyncadd [#allocation4], %s21
      %s24 = sshll.u32 [#allocation3], 4
      %s25 = int_to_ptr.vmem [resolvable:$true] %s24
      %27 = dma.hbm_to_vmem [thread:$0]  %s1, 64, %s25, [#allocation4]
    $region9: #{tpu_custom_call.1} parent=1 // pred_fallthru
      _
    // Predicated region
    $region10: #{tpu_custom_call.1} parent=1 // pred_check
      _
    $region11: #{tpu_custom_call.1} parent=1 // pred_check_branch
      %29 = sbr.rel (0) target = $region13
    $region12: #{tpu_custom_call.1} parent=1 // pred_region
      _
    $region13: #{tpu_custom_call.1} parent=1 // pred_fallthru
      _
    // Predicated region
    $region14: #{tpu_custom_call.1} parent=1 // pred_check
      _
    $region15: #{tpu_custom_call.1} parent=1 // pred_check_branch
      %31 = sbr.rel (0) target = $region17
    $region16: #{tpu_custom_call.1} parent=1 // pred_region
      _
    $region17: #{tpu_custom_call.1} parent=1 // pred_fallthru
      _
    // Predicated region
    $region18: #{tpu_custom_call.1} parent=1 // pred_check
      _
    $region19: #{tpu_custom_call.1} parent=1 // pred_check_branch
      %33 = sbr.rel (0) target = $region21
    $region20: #{tpu_custom_call.1} parent=1 // pred_region
      _
    $region21: #{tpu_custom_call.1} parent=1 // pred_fallthru
      _
    // Predicated region
    $region22: #{tpu_custom_call.1} parent=1 // pred_check
      _
    $region23: #{tpu_custom_call.1} parent=1 // pred_check_branch
      %35 = sbr.rel (0) target = $region25
    $region24: #{tpu_custom_call.1} parent=1 // pred_region
      %s37 = ssub.s32 512, 512
      %38 = vsyncadd [#allocation6], %s37
      %s39 = sshll.u32 [#allocation5], 4
      %s40 = int_to_ptr.vmem [resolvable:$true] %s39
      %45 = dma.hbm_to_vmem [thread:$0]  %s5, 512, %s40, [#allocation6], 128, 128, 8
    $region25: #{tpu_custom_call.1} parent=1 // pred_fallthru
      _
    // Predicated region
    $region26: #{tpu_custom_call.1} parent=1 // pred_check
      _
    $region27: #{tpu_custom_call.1} parent=1 // pred_check_branch
      %47 = sbr.rel (0) target = $region29
    $region28: #{tpu_custom_call.1} parent=1 // pred_region
      _
    $region29: #{tpu_custom_call.1} parent=1 // pred_fallthru
      _
    // Predicated region
    $region30: #{tpu_custom_call.1} parent=1 // pred_check
      _
    $region31: #{tpu_custom_call.1} parent=1 // pred_check_branch
      %49 = sbr.rel (0) target = $region33
    $region32: #{tpu_custom_call.1} parent=1 // pred_region
      _
    $region33: #{tpu_custom_call.1} parent=1 // pred_fallthru
      _
    // Predicated region
    $region34: #{tpu_custom_call.1} parent=1 // pred_check
      _
    $region35: #{tpu_custom_call.1} parent=1 // pred_check_branch
      %51 = sbr.rel (0) target = $region37
    $region36: #{tpu_custom_call.1} parent=1 // pred_region
      _
    $region37: #{tpu_custom_call.1} parent=1 // pred_fallthru
      _
    // Predicated region
    $region38: #{tpu_custom_call.1} parent=1 // pred_check
      _
    $region39: #{tpu_custom_call.1} parent=1 // pred_check_branch
      %53 = sbr.rel (0) target = $region41
    $region40: #{tpu_custom_call.1} parent=1 // pred_region
      %54 = dma.done [#allocation4], 64
    $region41: #{tpu_custom_call.1} parent=1 // pred_fallthru
      _
    // Predicated region
    $region42: #{tpu_custom_call.1} parent=1 // pred_check
      _
    $region43: #{tpu_custom_call.1} parent=1 // pred_check_branch
      %56 = sbr.rel (0) target = $region45
    $region44: #{tpu_custom_call.1} parent=1 // pred_region
      %57 = dma.done [#allocation6], 512
    $region45: #{tpu_custom_call.1} parent=1 // pred_fallthru
      _
    %v58 = vld [vmem:[%s2] sm:$0xff]
    %v59 = vld [vmem:[%s2 + $0x8] sm:$0xff]
    %v60 = vld [vmem:[%s2 + $0x10] sm:$0xff]
    %v61 = vld [vmem:[%s2 + $0x18] sm:$0xff]
    %v62 = vld [vmem:[%s4] sm:$0xff]
    %v63 = vld [vmem:[%s4 + $0x8] sm:$0xff]
    %v64 = vld [vmem:[%s4 + $0x10] sm:$0xff]
    %v65 = vld [vmem:[%s4 + $0x18] sm:$0xff]
    %v66 = vld [vmem:[#allocation5] sm:$0xff]
    %v67 = vld [vmem:[#allocation5 + $0x8] sm:$0xff]
    %v68 = vld [vmem:[#allocation5 + $0x10] sm:$0xff]
    %v69 = vld [vmem:[#allocation5 + $0x18] sm:$0xff]
    %v70 = vld [vmem:[%s6] sm:$0x1]
    %v72 = vlaneseq
    %v73 = vshrl.u32 %v72, 7
    %v74 = vsub.s32 0, %v73
    %v75 = vrot.slane %v70, %v74
    %v77 = vld [vmem:[%s0] sm:$0xff]
    %v78 = vld [vmem:[%s0 + $0x8] sm:$0xff]
    %v79 = vld [vmem:[#allocation3] sm:$0xf]
    %v80 = vld [vmem:[%s3] sm:$0x1]
    %v82 = vlaneseq
    %v83 = vshrl.u32 %v82, 7
    %v84 = vsub.s32 0, %v83
    %v85 = vrot.slane %v80, %v84
    %vm87 = vcmask 31744
    %v89 = vsel %vm87, %v77, 0
    %v92 = vsel %vm87, %v78, 0
    %vm94 = vcmask 1043456
    %v96 = vsel %vm94, %v79, 0
    %98 = vmatprep.subr.mxu0 0.0
    %99 = vmatpush1.msra.mxu0 %v96
    %100 = vmatprep.subr.mxu0 0.0
    %101 = vmatpush1.msra.mxu0 0.0
    %102 = vmatprep.subr.mxu0 0.0
    %103 = vmatpush1.msra.mxu0 0.0
    %104 = vmatprep.subr.mxu0 0.0
    %105 = vmatpush1.msra.mxu0 0.0
    %106 = vmatprep.subr.mxu0 0.0
    %107 = vmatpush1.msra.mxu0 0.0
    %108 = vmatprep.subr.mxu0 0.0
    %109 = vmatpush1.msra.mxu0 0.0
    %110 = vmatprep.subr.mxu0 0.0
    %111 = vmatpush1.msra.mxu0 0.0
    %112 = vmatprep.subr.mxu0 0.0
    %113 = vmatpush1.msra.mxu0 0.0
    %114 = vmatprep.subr.mxu0 0.0
    %115 = vmatpush1.msra.mxu0 0.0
    %116 = vmatprep.subr.mxu0 0.0
    %117 = vmatpush1.msra.mxu0 0.0
    %118 = vmatprep.subr.mxu0 0.0
    %119 = vmatpush1.msra.mxu0 0.0
    %120 = vmatprep.subr.mxu0 0.0
    %121 = vmatpush1.msra.mxu0 0.0
    %122 = vmatprep.subr.mxu0 0.0
    %123 = vmatpush1.msra.mxu0 0.0
    %124 = vmatprep.subr.mxu0 0.0
    %125 = vmatpush1.msra.mxu0 0.0
    %126 = vmatprep.subr.mxu0 0.0
    %127 = vmatpush1.msra.mxu0 0.0
    %128 = vmatprep.subr.mxu0 0.0
    %129 = vmatpush1.msra.mxu0 0.0
    %130 = vmatprep.subr.mxu0 0.0
    %131 = vmatpush1.msra.mxu0 0.0
    %132 = vmatprep.subr.mxu0 0.0
    %133 = vmatpush1.msra.mxu0 0.0
    %134 = vmatprep.subr.mxu0 0.0
    %135 = vmatpush1.msra.mxu0 0.0
    %136 = vmatprep.subr.mxu0 0.0
    %137 = vmatpush1.msra.mxu0 0.0
    %138 = vmatprep.subr.mxu0 0.0
    %139 = vmatpush1.msra.mxu0 0.0
    %140 = vmatprep.subr.mxu0 0.0
    %141 = vmatpush1.msra.mxu0 0.0
    %142 = vmatprep.subr.mxu0 0.0
    %143 = vmatpush1.msra.mxu0 0.0
    %144 = vmatprep.subr.mxu0 0.0
    %145 = vmatpush1.msra.mxu0 0.0
    %146 = vmatprep.subr.mxu0 0.0
    %147 = vmatpush1.msra.mxu0 0.0
    %148 = vmatprep.subr.mxu0 0.0
    %149 = vmatpush1.msra.mxu0 0.0
    %150 = vmatprep.subr.mxu0 0.0
    %151 = vmatpush1.msra.mxu0 0.0
    %152 = vmatprep.subr.mxu0 0.0
    %153 = vmatpush1.msra.mxu0 0.0
    %154 = vmatprep.subr.mxu0 0.0
    %155 = vmatpush1.msra.mxu0 0.0
    %156 = vmatprep.subr.mxu0 0.0
    %157 = vmatpush1.msra.mxu0 0.0
    %158 = vmatprep.subr.mxu0 0.0
    %159 = vmatpush1.msra.mxu0 0.0
    %160 = vmatprep.subr.mxu0 0.0
    %161 = vmatpush1.msra.mxu0 0.0
    %162 = vmatprep.mubr.f32.mxu0 0.0
    %163 = vmatmul.mubr.f32.gmra.mrb[0].mxu0 %v89
    %v164 = vpop.f32.mrb[0].mxu0
    %v165 = vadd.f32 %v85, %v164
    %v166 = vpop.f32.mrb[0].mxu0
    %167 = vmatprep.mubr.f32.mxu0 0.0
    %168 = vmatmul.mubr.f32.gmra.mrb[0].mxu0 %v92
    %v169 = vpop.f32.mrb[0].mxu0
    %v170 = vadd.f32 %v85, %v169
    %v171 = vpop.f32.mrb[0].mxu0
    %172 = vdwg.mxu0
    %v173 = vtanh.pop %v165
    %vm174 = vcmask 261120
    %v176 = vsel %vm174, %v173, 0
    %178 = vmatprep.subr.mxu0 0.0
    %179 = vmatpush1.msra.mxu0 %v58
    %180 = vmatprep.subr.mxu0 0.0
    %181 = vmatpush1.msra.mxu0 %v59
    %182 = vmatprep.subr.mxu0 0.0
    %183 = vmatpush1.msra.mxu0 %v60
    %184 = vmatprep.subr.mxu0 0.0
    %185 = vmatpush1.msra.mxu0 %v61
    %186 = vmatprep.subr.mxu0 0.0
    %187 = vmatpush1.msra.mxu0 0.0
    %188 = vmatprep.subr.mxu0 0.0
    %189 = vmatpush1.msra.mxu0 0.0
    %190 = vmatprep.subr.mxu0 0.0
    %191 = vmatpush1.msra.mxu0 0.0
    %192 = vmatprep.subr.mxu0 0.0
    %193 = vmatpush1.msra.mxu0 0.0
    %194 = vmatprep.subr.mxu0 0.0
    %195 = vmatpush1.msra.mxu0 0.0
    %196 = vmatprep.subr.mxu0 0.0
    %197 = vmatpush1.msra.mxu0 0.0
    %198 = vmatprep.subr.mxu0 0.0
    %199 = vmatpush1.msra.mxu0 0.0
    %200 = vmatprep.subr.mxu0 0.0
    %201 = vmatpush1.msra.mxu0 0.0
    %202 = vmatprep.subr.mxu0 0.0
    %203 = vmatpush1.msra.mxu0 0.0
    %204 = vmatprep.subr.mxu0 0.0
    %205 = vmatpush1.msra.mxu0 0.0
    %206 = vmatprep.subr.mxu0 0.0
    %207 = vmatpush1.msra.mxu0 0.0
    %208 = vmatprep.subr.mxu0 0.0
    %209 = vmatpush1.msra.mxu0 0.0
    %210 = vmatprep.subr.mxu0 0.0
    %211 = vmatpush1.msra.mxu0 0.0
    %212 = vmatprep.subr.mxu0 0.0
    %213 = vmatpush1.msra.mxu0 0.0
    %214 = vmatprep.subr.mxu0 0.0
    %215 = vmatpush1.msra.mxu0 0.0
    %216 = vmatprep.subr.mxu0 0.0
    %217 = vmatpush1.msra.mxu0 0.0
    %218 = vmatprep.subr.mxu0 0.0
    %219 = vmatpush1.msra.mxu0 0.0
    %220 = vmatprep.subr.mxu0 0.0
    %221 = vmatpush1.msra.mxu0 0.0
    %222 = vmatprep.subr.mxu0 0.0
    %223 = vmatpush1.msra.mxu0 0.0
    %224 = vmatprep.subr.mxu0 0.0
    %225 = vmatpush1.msra.mxu0 0.0
    %226 = vmatprep.subr.mxu0 0.0
    %227 = vmatpush1.msra.mxu0 0.0
    %228 = vmatprep.subr.mxu0 0.0
    %229 = vmatpush1.msra.mxu0 0.0
    %230 = vmatprep.subr.mxu0 0.0
    %231 = vmatpush1.msra.mxu0 0.0
    %232 = vmatprep.subr.mxu0 0.0
    %233 = vmatpush1.msra.mxu0 0.0
    %234 = vmatprep.subr.mxu0 0.0
    %235 = vmatpush1.msra.mxu0 0.0
    %236 = vmatprep.subr.mxu0 0.0
    %237 = vmatpush1.msra.mxu0 0.0
    %238 = vmatprep.subr.mxu0 0.0
    %239 = vmatpush1.msra.mxu0 0.0
    %240 = vmatprep.subr.mxu0 0.0
    %241 = vmatpush1.msra.mxu0 0.0
    %242 = vmatprep.mubr.f32.mxu0 0.0
    %243 = vmatmul.mubr.f32.gmra.mrb[0].mxu0 %v176
    %v244 = vpop.f32.mrb[0].mxu0
    %v245 = vadd.f32 0.0, %v244
    %v246 = vpop.f32.mrb[0].mxu0
    %247 = vdwg.mxu0
    %v249 = vrot.slane %v245, 6
    %v251 = vadd.f32 %v165, %v249
    %v252 = vtanh.pop %v251
    %v254 = vrot.slane %v252, 2
    %v255 = vsel %vm174, %v254, 0
    %257 = vmatprep.subr.mxu0 0.0
    %258 = vmatpush1.msra.mxu0 %v58
    %259 = vmatprep.subr.mxu0 0.0
    %260 = vmatpush1.msra.mxu0 %v59
    %261 = vmatprep.subr.mxu0 0.0
    %262 = vmatpush1.msra.mxu0 %v60
    %263 = vmatprep.subr.mxu0 0.0
    %264 = vmatpush1.msra.mxu0 %v61
    %265 = vmatprep.subr.mxu0 0.0
    %266 = vmatpush1.msra.mxu0 0.0
    %267 = vmatprep.subr.mxu0 0.0
    %268 = vmatpush1.msra.mxu0 0.0
    %269 = vmatprep.subr.mxu0 0.0
    %270 = vmatpush1.msra.mxu0 0.0
    %271 = vmatprep.subr.mxu0 0.0
    %272 = vmatpush1.msra.mxu0 0.0
    %273 = vmatprep.subr.mxu0 0.0
    %274 = vmatpush1.msra.mxu0 0.0
    %275 = vmatprep.subr.mxu0 0.0
    %276 = vmatpush1.msra.mxu0 0.0
    %277 = vmatprep.subr.mxu0 0.0
    %278 = vmatpush1.msra.mxu0 0.0
    %279 = vmatprep.subr.mxu0 0.0
    %280 = vmatpush1.msra.mxu0 0.0
    %281 = vmatprep.subr.mxu0 0.0
    %282 = vmatpush1.msra.mxu0 0.0
    %283 = vmatprep.subr.mxu0 0.0
    %284 = vmatpush1.msra.mxu0 0.0
    %285 = vmatprep.subr.mxu0 0.0
    %286 = vmatpush1.msra.mxu0 0.0
    %287 = vmatprep.subr.mxu0 0.0
    %288 = vmatpush1.msra.mxu0 0.0
    %289 = vmatprep.subr.mxu0 0.0
    %290 = vmatpush1.msra.mxu0 0.0
    %291 = vmatprep.subr.mxu0 0.0
    %292 = vmatpush1.msra.mxu0 0.0
    %293 = vmatprep.subr.mxu0 0.0
    %294 = vmatpush1.msra.mxu0 0.0
    %295 = vmatprep.subr.mxu0 0.0
    %296 = vmatpush1.msra.mxu0 0.0
    %297 = vmatprep.subr.mxu0 0.0
    %298 = vmatpush1.msra.mxu0 0.0
    %299 = vmatprep.subr.mxu0 0.0
    %300 = vmatpush1.msra.mxu0 0.0
    %301 = vmatprep.subr.mxu0 0.0
    %302 = vmatpush1.msra.mxu0 0.0
    %303 = vmatprep.subr.mxu0 0.0
    %304 = vmatpush1.msra.mxu0 0.0
    %305 = vmatprep.subr.mxu0 0.0
    %306 = vmatpush1.msra.mxu0 0.0
    %307 = vmatprep.subr.mxu0 0.0
    %308 = vmatpush1.msra.mxu0 0.0
    %309 = vmatprep.subr.mxu0 0.0
    %310 = vmatpush1.msra.mxu0 0.0
    %311 = vmatprep.subr.mxu0 0.0
    %312 = vmatpush1.msra.mxu0 0.0
    %313 = vmatprep.subr.mxu0 0.0
    %314 = vmatpush1.msra.mxu0 0.0
    %315 = vmatprep.subr.mxu0 0.0
    %316 = vmatpush1.msra.mxu0 0.0
    %317 = vmatprep.subr.mxu0 0.0
    %318 = vmatpush1.msra.mxu0 0.0
    %319 = vmatprep.subr.mxu0 0.0
    %320 = vmatpush1.msra.mxu0 0.0
    %321 = vmatprep.mubr.f32.mxu0 0.0
    %322 = vmatmul.mubr.f32.gmra.mrb[0].mxu0 %v255
    %v323 = vpop.f32.mrb[0].mxu0
    %v324 = vadd.f32 0.0, %v323
    %v325 = vpop.f32.mrb[0].mxu0
    %326 = vdwg.mxu0
    %v328 = vrot.slane %v324, 4
    %v330 = vadd.f32 %v165, %v328
    %v331 = vtanh.pop %v330
    %v333 = vrot.slane %v331, 4
    %v334 = vsel %vm174, %v333, 0
    %336 = vmatprep.subr.mxu0 0.0
    %337 = vmatpush1.msra.mxu0 %v58
    %338 = vmatprep.subr.mxu0 0.0
    %339 = vmatpush1.msra.mxu0 %v59
    %340 = vmatprep.subr.mxu0 0.0
    %341 = vmatpush1.msra.mxu0 %v60
    %342 = vmatprep.subr.mxu0 0.0
    %343 = vmatpush1.msra.mxu0 %v61
    %344 = vmatprep.subr.mxu0 0.0
    %345 = vmatpush1.msra.mxu0 0.0
    %346 = vmatprep.subr.mxu0 0.0
    %347 = vmatpush1.msra.mxu0 0.0
    %348 = vmatprep.subr.mxu0 0.0
    %349 = vmatpush1.msra.mxu0 0.0
    %350 = vmatprep.subr.mxu0 0.0
    %351 = vmatpush1.msra.mxu0 0.0
    %352 = vmatprep.subr.mxu0 0.0
    %353 = vmatpush1.msra.mxu0 0.0
    %354 = vmatprep.subr.mxu0 0.0
    %355 = vmatpush1.msra.mxu0 0.0
    %356 = vmatprep.subr.mxu0 0.0
    %357 = vmatpush1.msra.mxu0 0.0
    %358 = vmatprep.subr.mxu0 0.0
    %359 = vmatpush1.msra.mxu0 0.0
    %360 = vmatprep.subr.mxu0 0.0
    %361 = vmatpush1.msra.mxu0 0.0
    %362 = vmatprep.subr.mxu0 0.0
    %363 = vmatpush1.msra.mxu0 0.0
    %364 = vmatprep.subr.mxu0 0.0
    %365 = vmatpush1.msra.mxu0 0.0
    %366 = vmatprep.subr.mxu0 0.0
    %367 = vmatpush1.msra.mxu0 0.0
    %368 = vmatprep.subr.mxu0 0.0
    %369 = vmatpush1.msra.mxu0 0.0
    %370 = vmatprep.subr.mxu0 0.0
    %371 = vmatpush1.msra.mxu0 0.0
    %372 = vmatprep.subr.mxu0 0.0
    %373 = vmatpush1.msra.mxu0 0.0
    %374 = vmatprep.subr.mxu0 0.0
    %375 = vmatpush1.msra.mxu0 0.0
    %376 = vmatprep.subr.mxu0 0.0
    %377 = vmatpush1.msra.mxu0 0.0
    %378 = vmatprep.subr.mxu0 0.0
    %379 = vmatpush1.msra.mxu0 0.0
    %380 = vmatprep.subr.mxu0 0.0
    %381 = vmatpush1.msra.mxu0 0.0
    %382 = vmatprep.subr.mxu0 0.0
    %383 = vmatpush1.msra.mxu0 0.0
    %384 = vmatprep.subr.mxu0 0.0
    %385 = vmatpush1.msra.mxu0 0.0
    %386 = vmatprep.subr.mxu0 0.0
    %387 = vmatpush1.msra.mxu0 0.0
    %388 = vmatprep.subr.mxu0 0.0
    %389 = vmatpush1.msra.mxu0 0.0
    %390 = vmatprep.subr.mxu0 0.0
    %391 = vmatpush1.msra.mxu0 0.0
    %392 = vmatprep.subr.mxu0 0.0
    %393 = vmatpush1.msra.mxu0 0.0
    %394 = vmatprep.subr.mxu0 0.0
    %395 = vmatpush1.msra.mxu0 0.0
    %396 = vmatprep.subr.mxu0 0.0
    %397 = vmatpush1.msra.mxu0 0.0
    %398 = vmatprep.subr.mxu0 0.0
    %399 = vmatpush1.msra.mxu0 0.0
    %400 = vmatprep.mubr.f32.mxu0 0.0
    %401 = vmatmul.mubr.f32.gmra.mrb[0].mxu0 %v334
    %v402 = vpop.f32.mrb[0].mxu0
    %v403 = vadd.f32 0.0, %v402
    %v404 = vpop.f32.mrb[0].mxu0
    %405 = vdwg.mxu0
    %v407 = vrot.slane %v403, 2
    %v409 = vadd.f32 %v165, %v407
    %v410 = vtanh.pop %v409
    %v412 = vrot.slane %v410, 6
    %v413 = vsel %vm174, %v412, 0
    %415 = vmatprep.subr.mxu0 0.0
    %416 = vmatpush1.msra.mxu0 %v58
    %417 = vmatprep.subr.mxu0 0.0
    %418 = vmatpush1.msra.mxu0 %v59
    %419 = vmatprep.subr.mxu0 0.0
    %420 = vmatpush1.msra.mxu0 %v60
    %421 = vmatprep.subr.mxu0 0.0
    %422 = vmatpush1.msra.mxu0 %v61
    %423 = vmatprep.subr.mxu0 0.0
    %424 = vmatpush1.msra.mxu0 0.0
    %425 = vmatprep.subr.mxu0 0.0
    %426 = vmatpush1.msra.mxu0 0.0
    %427 = vmatprep.subr.mxu0 0.0
    %428 = vmatpush1.msra.mxu0 0.0
    %429 = vmatprep.subr.mxu0 0.0
    %430 = vmatpush1.msra.mxu0 0.0
    %431 = vmatprep.subr.mxu0 0.0
    %432 = vmatpush1.msra.mxu0 0.0
    %433 = vmatprep.subr.mxu0 0.0
    %434 = vmatpush1.msra.mxu0 0.0
    %435 = vmatprep.subr.mxu0 0.0
    %436 = vmatpush1.msra.mxu0 0.0
    %437 = vmatprep.subr.mxu0 0.0
    %438 = vmatpush1.msra.mxu0 0.0
    %439 = vmatprep.subr.mxu0 0.0
    %440 = vmatpush1.msra.mxu0 0.0
    %441 = vmatprep.subr.mxu0 0.0
    %442 = vmatpush1.msra.mxu0 0.0
    %443 = vmatprep.subr.mxu0 0.0
    %444 = vmatpush1.msra.mxu0 0.0
    %445 = vmatprep.subr.mxu0 0.0
    %446 = vmatpush1.msra.mxu0 0.0
    %447 = vmatprep.subr.mxu0 0.0
    %448 = vmatpush1.msra.mxu0 0.0
    %449 = vmatprep.subr.mxu0 0.0
    %450 = vmatpush1.msra.mxu0 0.0
    %451 = vmatprep.subr.mxu0 0.0
    %452 = vmatpush1.msra.mxu0 0.0
    %453 = vmatprep.subr.mxu0 0.0
    %454 = vmatpush1.msra.mxu0 0.0
    %455 = vmatprep.subr.mxu0 0.0
    %456 = vmatpush1.msra.mxu0 0.0
    %457 = vmatprep.subr.mxu0 0.0
    %458 = vmatpush1.msra.mxu0 0.0
    %459 = vmatprep.subr.mxu0 0.0
    %460 = vmatpush1.msra.mxu0 0.0
    %461 = vmatprep.subr.mxu0 0.0
    %462 = vmatpush1.msra.mxu0 0.0
    %463 = vmatprep.subr.mxu0 0.0
    %464 = vmatpush1.msra.mxu0 0.0
    %465 = vmatprep.subr.mxu0 0.0
    %466 = vmatpush1.msra.mxu0 0.0
    %467 = vmatprep.subr.mxu0 0.0
    %468 = vmatpush1.msra.mxu0 0.0
    %469 = vmatprep.subr.mxu0 0.0
    %470 = vmatpush1.msra.mxu0 0.0
    %471 = vmatprep.subr.mxu0 0.0
    %472 = vmatpush1.msra.mxu0 0.0
    %473 = vmatprep.subr.mxu0 0.0
    %474 = vmatpush1.msra.mxu0 0.0
    %475 = vmatprep.subr.mxu0 0.0
    %476 = vmatpush1.msra.mxu0 0.0
    %477 = vmatprep.subr.mxu0 0.0
    %478 = vmatpush1.msra.mxu0 0.0
    %479 = vmatprep.mubr.f32.mxu0 0.0
    %480 = vmatmul.mubr.f32.gmra.mrb[0].mxu0 %v413
    %v481 = vpop.f32.mrb[0].mxu0
    %v482 = vadd.f32 0.0, %v481
    %v483 = vpop.f32.mrb[0].mxu0
    %484 = vdwg.mxu0
    %v485 = vadd.f32 %v170, %v482
    %v486 = vtanh.pop %v485
    %v488 = vsel %vm174, %v486, 0
    %490 = vmatprep.subr.mxu0 0.0
    %491 = vmatpush1.msra.mxu0 %v58
    %492 = vmatprep.subr.mxu0 0.0
    %493 = vmatpush1.msra.mxu0 %v59
    %494 = vmatprep.subr.mxu0 0.0
    %495 = vmatpush1.msra.mxu0 %v60
    %496 = vmatprep.subr.mxu0 0.0
    %497 = vmatpush1.msra.mxu0 %v61
    %498 = vmatprep.subr.mxu0 0.0
    %499 = vmatpush1.msra.mxu0 0.0
    %500 = vmatprep.subr.mxu0 0.0
    %501 = vmatpush1.msra.mxu0 0.0
    %502 = vmatprep.subr.mxu0 0.0
    %503 = vmatpush1.msra.mxu0 0.0
    %504 = vmatprep.subr.mxu0 0.0
    %505 = vmatpush1.msra.mxu0 0.0
    %506 = vmatprep.subr.mxu0 0.0
    %507 = vmatpush1.msra.mxu0 0.0
    %508 = vmatprep.subr.mxu0 0.0
    %509 = vmatpush1.msra.mxu0 0.0
    %510 = vmatprep.subr.mxu0 0.0
    %511 = vmatpush1.msra.mxu0 0.0
    %512 = vmatprep.subr.mxu0 0.0
    %513 = vmatpush1.msra.mxu0 0.0
    %514 = vmatprep.subr.mxu0 0.0
    %515 = vmatpush1.msra.mxu0 0.0
    %516 = vmatprep.subr.mxu0 0.0
    %517 = vmatpush1.msra.mxu0 0.0
    %518 = vmatprep.subr.mxu0 0.0
    %519 = vmatpush1.msra.mxu0 0.0
    %520 = vmatprep.subr.mxu0 0.0
    %521 = vmatpush1.msra.mxu0 0.0
    %522 = vmatprep.subr.mxu0 0.0
    %523 = vmatpush1.msra.mxu0 0.0
    %524 = vmatprep.subr.mxu0 0.0
    %525 = vmatpush1.msra.mxu0 0.0
    %526 = vmatprep.subr.mxu0 0.0
    %527 = vmatpush1.msra.mxu0 0.0
    %528 = vmatprep.subr.mxu0 0.0
    %529 = vmatpush1.msra.mxu0 0.0
    %530 = vmatprep.subr.mxu0 0.0
    %531 = vmatpush1.msra.mxu0 0.0
    %532 = vmatprep.subr.mxu0 0.0
    %533 = vmatpush1.msra.mxu0 0.0
    %534 = vmatprep.subr.mxu0 0.0
    %535 = vmatpush1.msra.mxu0 0.0
    %536 = vmatprep.subr.mxu0 0.0
    %537 = vmatpush1.msra.mxu0 0.0
    %538 = vmatprep.subr.mxu0 0.0
    %539 = vmatpush1.msra.mxu0 0.0
    %540 = vmatprep.subr.mxu0 0.0
    %541 = vmatpush1.msra.mxu0 0.0
    %542 = vmatprep.subr.mxu0 0.0
    %543 = vmatpush1.msra.mxu0 0.0
    %544 = vmatprep.subr.mxu0 0.0
    %545 = vmatpush1.msra.mxu0 0.0
    %546 = vmatprep.subr.mxu0 0.0
    %547 = vmatpush1.msra.mxu0 0.0
    %548 = vmatprep.subr.mxu0 0.0
    %549 = vmatpush1.msra.mxu0 0.0
    %550 = vmatprep.subr.mxu0 0.0
    %551 = vmatpush1.msra.mxu0 0.0
    %552 = vmatprep.subr.mxu0 0.0
    %553 = vmatpush1.msra.mxu0 0.0
    %554 = vmatprep.mubr.f32.mxu0 0.0
    %555 = vmatmul.mubr.f32.gmra.mrb[0].mxu0 %v488
    %v556 = vpop.f32.mrb[0].mxu0
    %v557 = vadd.f32 0.0, %v556
    %v558 = vpop.f32.mrb[0].mxu0
    %559 = vdwg.mxu0
    %v561 = vrot.slane %v557, 6
    %v563 = vadd.f32 %v170, %v561
    %v564 = vtanh.pop %v563
    %v566 = vrot.slane %v564, 2
    %v567 = vsel %vm174, %v566, 0
    %569 = vmatprep.subr.mxu0 0.0
    %570 = vmatpush1.msra.mxu0 %v58
    %571 = vmatprep.subr.mxu0 0.0
    %572 = vmatpush1.msra.mxu0 %v59
    %573 = vmatprep.subr.mxu0 0.0
    %574 = vmatpush1.msra.mxu0 %v60
    %575 = vmatprep.subr.mxu0 0.0
    %576 = vmatpush1.msra.mxu0 %v61
    %577 = vmatprep.subr.mxu0 0.0
    %578 = vmatpush1.msra.mxu0 0.0
    %579 = vmatprep.subr.mxu0 0.0
    %580 = vmatpush1.msra.mxu0 0.0
    %581 = vmatprep.subr.mxu0 0.0
    %582 = vmatpush1.msra.mxu0 0.0
    %583 = vmatprep.subr.mxu0 0.0
    %584 = vmatpush1.msra.mxu0 0.0
    %585 = vmatprep.subr.mxu0 0.0
    %586 = vmatpush1.msra.mxu0 0.0
    %587 = vmatprep.subr.mxu0 0.0
    %588 = vmatpush1.msra.mxu0 0.0
    %589 = vmatprep.subr.mxu0 0.0
    %590 = vmatpush1.msra.mxu0 0.0
    %591 = vmatprep.subr.mxu0 0.0
    %592 = vmatpush1.msra.mxu0 0.0
    %593 = vmatprep.subr.mxu0 0.0
    %594 = vmatpush1.msra.mxu0 0.0
    %595 = vmatprep.subr.mxu0 0.0
    %596 = vmatpush1.msra.mxu0 0.0
    %597 = vmatprep.subr.mxu0 0.0
    %598 = vmatpush1.msra.mxu0 0.0
    %599 = vmatprep.subr.mxu0 0.0
    %600 = vmatpush1.msra.mxu0 0.0
    %601 = vmatprep.subr.mxu0 0.0
    %602 = vmatpush1.msra.mxu0 0.0
    %603 = vmatprep.subr.mxu0 0.0
    %604 = vmatpush1.msra.mxu0 0.0
    %605 = vmatprep.subr.mxu0 0.0
    %606 = vmatpush1.msra.mxu0 0.0
    %607 = vmatprep.subr.mxu0 0.0
    %608 = vmatpush1.msra.mxu0 0.0
    %609 = vmatprep.subr.mxu0 0.0
    %610 = vmatpush1.msra.mxu0 0.0
    %611 = vmatprep.subr.mxu0 0.0
    %612 = vmatpush1.msra.mxu0 0.0
    %613 = vmatprep.subr.mxu0 0.0
    %614 = vmatpush1.msra.mxu0 0.0
    %615 = vmatprep.subr.mxu0 0.0
    %616 = vmatpush1.msra.mxu0 0.0
    %617 = vmatprep.subr.mxu0 0.0
    %618 = vmatpush1.msra.mxu0 0.0
    %619 = vmatprep.subr.mxu0 0.0
    %620 = vmatpush1.msra.mxu0 0.0
    %621 = vmatprep.subr.mxu0 0.0
    %622 = vmatpush1.msra.mxu0 0.0
    %623 = vmatprep.subr.mxu0 0.0
    %624 = vmatpush1.msra.mxu0 0.0
    %625 = vmatprep.subr.mxu0 0.0
    %626 = vmatpush1.msra.mxu0 0.0
    %627 = vmatprep.subr.mxu0 0.0
    %628 = vmatpush1.msra.mxu0 0.0
    %629 = vmatprep.subr.mxu0 0.0
    %630 = vmatpush1.msra.mxu0 0.0
    %631 = vmatprep.subr.mxu0 0.0
    %632 = vmatpush1.msra.mxu0 0.0
    %633 = vmatprep.mubr.f32.mxu0 0.0
    %634 = vmatmul.mubr.f32.gmra.mrb[0].mxu0 %v567
    %v635 = vpop.f32.mrb[0].mxu0
    %v636 = vadd.f32 0.0, %v635
    %v637 = vpop.f32.mrb[0].mxu0
    %638 = vdwg.mxu0
    %v640 = vrot.slane %v636, 4
    %v642 = vadd.f32 %v170, %v640
    %v643 = vtanh.pop %v642
    %v645 = vrot.slane %v643, 4
    %v646 = vsel %vm174, %v645, 0
    %648 = vmatprep.subr.mxu0 0.0
    %649 = vmatpush1.msra.mxu0 %v58
    %650 = vmatprep.subr.mxu0 0.0
    %651 = vmatpush1.msra.mxu0 %v59
    %652 = vmatprep.subr.mxu0 0.0
    %653 = vmatpush1.msra.mxu0 %v60
    %654 = vmatprep.subr.mxu0 0.0
    %655 = vmatpush1.msra.mxu0 %v61
    %656 = vmatprep.subr.mxu0 0.0
    %657 = vmatpush1.msra.mxu0 0.0
    %658 = vmatprep.subr.mxu0 0.0
    %659 = vmatpush1.msra.mxu0 0.0
    %660 = vmatprep.subr.mxu0 0.0
    %661 = vmatpush1.msra.mxu0 0.0
    %662 = vmatprep.subr.mxu0 0.0
    %663 = vmatpush1.msra.mxu0 0.0
    %664 = vmatprep.subr.mxu0 0.0
    %665 = vmatpush1.msra.mxu0 0.0
    %666 = vmatprep.subr.mxu0 0.0
    %667 = vmatpush1.msra.mxu0 0.0
    %668 = vmatprep.subr.mxu0 0.0
    %669 = vmatpush1.msra.mxu0 0.0
    %670 = vmatprep.subr.mxu0 0.0
    %671 = vmatpush1.msra.mxu0 0.0
    %672 = vmatprep.subr.mxu0 0.0
    %673 = vmatpush1.msra.mxu0 0.0
    %674 = vmatprep.subr.mxu0 0.0
    %675 = vmatpush1.msra.mxu0 0.0
    %676 = vmatprep.subr.mxu0 0.0
    %677 = vmatpush1.msra.mxu0 0.0
    %678 = vmatprep.subr.mxu0 0.0
    %679 = vmatpush1.msra.mxu0 0.0
    %680 = vmatprep.subr.mxu0 0.0
    %681 = vmatpush1.msra.mxu0 0.0
    %682 = vmatprep.subr.mxu0 0.0
    %683 = vmatpush1.msra.mxu0 0.0
    %684 = vmatprep.subr.mxu0 0.0
    %685 = vmatpush1.msra.mxu0 0.0
    %686 = vmatprep.subr.mxu0 0.0
    %687 = vmatpush1.msra.mxu0 0.0
    %688 = vmatprep.subr.mxu0 0.0
    %689 = vmatpush1.msra.mxu0 0.0
    %690 = vmatprep.subr.mxu0 0.0
    %691 = vmatpush1.msra.mxu0 0.0
    %692 = vmatprep.subr.mxu0 0.0
    %693 = vmatpush1.msra.mxu0 0.0
    %694 = vmatprep.subr.mxu0 0.0
    %695 = vmatpush1.msra.mxu0 0.0
    %696 = vmatprep.subr.mxu0 0.0
    %697 = vmatpush1.msra.mxu0 0.0
    %698 = vmatprep.subr.mxu0 0.0
    %699 = vmatpush1.msra.mxu0 0.0
    %700 = vmatprep.subr.mxu0 0.0
    %701 = vmatpush1.msra.mxu0 0.0
    %702 = vmatprep.subr.mxu0 0.0
    %703 = vmatpush1.msra.mxu0 0.0
    %704 = vmatprep.subr.mxu0 0.0
    %705 = vmatpush1.msra.mxu0 0.0
    %706 = vmatprep.subr.mxu0 0.0
    %707 = vmatpush1.msra.mxu0 0.0
    %708 = vmatprep.subr.mxu0 0.0
    %709 = vmatpush1.msra.mxu0 0.0
    %710 = vmatprep.subr.mxu0 0.0
    %711 = vmatpush1.msra.mxu0 0.0
    %712 = vmatprep.mubr.f32.mxu0 0.0
    %713 = vmatmul.mubr.f32.gmra.mrb[0].mxu0 %v646
    %v714 = vpop.f32.mrb[0].mxu0
    %v715 = vadd.f32 0.0, %v714
    %v716 = vpop.f32.mrb[0].mxu0
    %717 = vdwg.mxu0
    %v719 = vrot.slane %v715, 2
    %v721 = vadd.f32 %v170, %v719
    %v722 = vtanh.pop %v721
    %v724 = vrot.slane %v722, 6
    %v725 = vsel %vm174, %v724, 0
    %727 = vmatprep.subr.mxu0 0.0
    %728 = vmatpush1.msra.mxu0 %v62
    %729 = vmatprep.subr.mxu0 0.0
    %730 = vmatpush1.msra.mxu0 %v63
    %731 = vmatprep.subr.mxu0 0.0
    %732 = vmatpush1.msra.mxu0 %v64
    %733 = vmatprep.subr.mxu0 0.0
    %734 = vmatpush1.msra.mxu0 %v65
    %735 = vmatprep.subr.mxu0 0.0
    %736 = vmatpush1.msra.mxu0 0.0
    %737 = vmatprep.subr.mxu0 0.0
    %738 = vmatpush1.msra.mxu0 0.0
    %739 = vmatprep.subr.mxu0 0.0
    %740 = vmatpush1.msra.mxu0 0.0
    %741 = vmatprep.subr.mxu0 0.0
    %742 = vmatpush1.msra.mxu0 0.0
    %743 = vmatprep.subr.mxu0 0.0
    %744 = vmatpush1.msra.mxu0 0.0
    %745 = vmatprep.subr.mxu0 0.0
    %746 = vmatpush1.msra.mxu0 0.0
    %747 = vmatprep.subr.mxu0 0.0
    %748 = vmatpush1.msra.mxu0 0.0
    %749 = vmatprep.subr.mxu0 0.0
    %750 = vmatpush1.msra.mxu0 0.0
    %751 = vmatprep.subr.mxu0 0.0
    %752 = vmatpush1.msra.mxu0 0.0
    %753 = vmatprep.subr.mxu0 0.0
    %754 = vmatpush1.msra.mxu0 0.0
    %755 = vmatprep.subr.mxu0 0.0
    %756 = vmatpush1.msra.mxu0 0.0
    %757 = vmatprep.subr.mxu0 0.0
    %758 = vmatpush1.msra.mxu0 0.0
    %759 = vmatprep.subr.mxu0 0.0
    %760 = vmatpush1.msra.mxu0 0.0
    %761 = vmatprep.subr.mxu0 0.0
    %762 = vmatpush1.msra.mxu0 0.0
    %763 = vmatprep.subr.mxu0 0.0
    %764 = vmatpush1.msra.mxu0 0.0
    %765 = vmatprep.subr.mxu0 0.0
    %766 = vmatpush1.msra.mxu0 0.0
    %767 = vmatprep.subr.mxu0 0.0
    %768 = vmatpush1.msra.mxu0 0.0
    %769 = vmatprep.subr.mxu0 0.0
    %770 = vmatpush1.msra.mxu0 0.0
    %771 = vmatprep.subr.mxu0 0.0
    %772 = vmatpush1.msra.mxu0 0.0
    %773 = vmatprep.subr.mxu0 0.0
    %774 = vmatpush1.msra.mxu0 0.0
    %775 = vmatprep.subr.mxu0 0.0
    %776 = vmatpush1.msra.mxu0 0.0
    %777 = vmatprep.subr.mxu0 0.0
    %778 = vmatpush1.msra.mxu0 0.0
    %779 = vmatprep.subr.mxu0 0.0
    %780 = vmatpush1.msra.mxu0 0.0
    %781 = vmatprep.subr.mxu0 0.0
    %782 = vmatpush1.msra.mxu0 0.0
    %783 = vmatprep.subr.mxu0 0.0
    %784 = vmatpush1.msra.mxu0 0.0
    %785 = vmatprep.subr.mxu0 0.0
    %786 = vmatpush1.msra.mxu0 0.0
    %787 = vmatprep.subr.mxu0 0.0
    %788 = vmatpush1.msra.mxu0 0.0
    %789 = vmatprep.subr.mxu0 0.0
    %790 = vmatpush1.msra.mxu0 0.0
    %791 = vmatprep.mubr.f32.mxu0 0.0
    %792 = vmatmul.mubr.f32.gmra.mrb[0].mxu0 %v725
    %v793 = vpop.f32.mrb[0].mxu0
    %v794 = vadd.f32 %v75, %v793
    %v795 = vpop.f32.mrb[0].mxu0
    %796 = vdwg.mxu0
    %v797 = vtanh.pop %v794
    %vm798 = vcmask 254976
    %799 = vst.msk [vmem:[#allocation2] sm:$0x3] %vm798, %v797
    %v801 = vsel %vm174, %v797, 0
    %803 = vmatprep.subr.mxu0 0.0
    %804 = vmatpush1.msra.mxu0 %v66
    %805 = vmatprep.subr.mxu0 0.0
    %806 = vmatpush1.msra.mxu0 %v67
    %807 = vmatprep.subr.mxu0 0.0
    %808 = vmatpush1.msra.mxu0 %v68
    %809 = vmatprep.subr.mxu0 0.0
    %810 = vmatpush1.msra.mxu0 %v69
    %811 = vmatprep.subr.mxu0 0.0
    %812 = vmatpush1.msra.mxu0 0.0
    %813 = vmatprep.subr.mxu0 0.0
    %814 = vmatpush1.msra.mxu0 0.0
    %815 = vmatprep.subr.mxu0 0.0
    %816 = vmatpush1.msra.mxu0 0.0
    %817 = vmatprep.subr.mxu0 0.0
    %818 = vmatpush1.msra.mxu0 0.0
    %819 = vmatprep.subr.mxu0 0.0
    %820 = vmatpush1.msra.mxu0 0.0
    %821 = vmatprep.subr.mxu0 0.0
    %822 = vmatpush1.msra.mxu0 0.0
    %823 = vmatprep.subr.mxu0 0.0
    %824 = vmatpush1.msra.mxu0 0.0
    %825 = vmatprep.subr.mxu0 0.0
    %826 = vmatpush1.msra.mxu0 0.0
    %827 = vmatprep.subr.mxu0 0.0
    %828 = vmatpush1.msra.mxu0 0.0
    %829 = vmatprep.subr.mxu0 0.0
    %830 = vmatpush1.msra.mxu0 0.0
    %831 = vmatprep.subr.mxu0 0.0
    %832 = vmatpush1.msra.mxu0 0.0
    %833 = vmatprep.subr.mxu0 0.0
    %834 = vmatpush1.msra.mxu0 0.0
    %835 = vmatprep.subr.mxu0 0.0
    %836 = vmatpush1.msra.mxu0 0.0
    %837 = vmatprep.subr.mxu0 0.0
    %838 = vmatpush1.msra.mxu0 0.0
    %839 = vmatprep.subr.mxu0 0.0
    %840 = vmatpush1.msra.mxu0 0.0
    %841 = vmatprep.subr.mxu0 0.0
    %842 = vmatpush1.msra.mxu0 0.0
    %843 = vmatprep.subr.mxu0 0.0
    %844 = vmatpush1.msra.mxu0 0.0
    %845 = vmatprep.subr.mxu0 0.0
    %846 = vmatpush1.msra.mxu0 0.0
    %847 = vmatprep.subr.mxu0 0.0
    %848 = vmatpush1.msra.mxu0 0.0
    %849 = vmatprep.subr.mxu0 0.0
    %850 = vmatpush1.msra.mxu0 0.0
    %851 = vmatprep.subr.mxu0 0.0
    %852 = vmatpush1.msra.mxu0 0.0
    %853 = vmatprep.subr.mxu0 0.0
    %854 = vmatpush1.msra.mxu0 0.0
    %855 = vmatprep.subr.mxu0 0.0
    %856 = vmatpush1.msra.mxu0 0.0
    %857 = vmatprep.subr.mxu0 0.0
    %858 = vmatpush1.msra.mxu0 0.0
    %859 = vmatprep.subr.mxu0 0.0
    %860 = vmatpush1.msra.mxu0 0.0
    %861 = vmatprep.subr.mxu0 0.0
    %862 = vmatpush1.msra.mxu0 0.0
    %863 = vmatprep.subr.mxu0 0.0
    %864 = vmatpush1.msra.mxu0 0.0
    %865 = vmatprep.subr.mxu0 0.0
    %866 = vmatpush1.msra.mxu0 0.0
    %867 = vmatprep.mubr.f32.mxu0 0.0
    %868 = vmatmul.mubr.f32.gmra.mrb[0].mxu0 %v801
    %v869 = vpop.f32.mrb[0].mxu0
    %v870 = vadd.f32 %v75, %v869
    %v871 = vpop.f32.mrb[0].mxu0
    %872 = vdwg.mxu0
    %v873 = vtanh.pop %v870
    %874 = vst.msk [vmem:[#allocation2 + $0x2] sm:$0x3] %vm798, %v873
    %v876 = vsel %vm174, %v873, 0
    %878 = vmatprep.subr.mxu0 0.0
    %879 = vmatpush1.msra.mxu0 %v66
    %880 = vmatprep.subr.mxu0 0.0
    %881 = vmatpush1.msra.mxu0 %v67
    %882 = vmatprep.subr.mxu0 0.0
    %883 = vmatpush1.msra.mxu0 %v68
    %884 = vmatprep.subr.mxu0 0.0
    %885 = vmatpush1.msra.mxu0 %v69
    %886 = vmatprep.subr.mxu0 0.0
    %887 = vmatpush1.msra.mxu0 0.0
    %888 = vmatprep.subr.mxu0 0.0
    %889 = vmatpush1.msra.mxu0 0.0
    %890 = vmatprep.subr.mxu0 0.0
    %891 = vmatpush1.msra.mxu0 0.0
    %892 = vmatprep.subr.mxu0 0.0
    %893 = vmatpush1.msra.mxu0 0.0
    %894 = vmatprep.subr.mxu0 0.0
    %895 = vmatpush1.msra.mxu0 0.0
    %896 = vmatprep.subr.mxu0 0.0
    %897 = vmatpush1.msra.mxu0 0.0
    %898 = vmatprep.subr.mxu0 0.0
    %899 = vmatpush1.msra.mxu0 0.0
    %900 = vmatprep.subr.mxu0 0.0
    %901 = vmatpush1.msra.mxu0 0.0
    %902 = vmatprep.subr.mxu0 0.0
    %903 = vmatpush1.msra.mxu0 0.0
    %904 = vmatprep.subr.mxu0 0.0
    %905 = vmatpush1.msra.mxu0 0.0
    %906 = vmatprep.subr.mxu0 0.0
    %907 = vmatpush1.msra.mxu0 0.0
    %908 = vmatprep.subr.mxu0 0.0
    %909 = vmatpush1.msra.mxu0 0.0
    %910 = vmatprep.subr.mxu0 0.0
    %911 = vmatpush1.msra.mxu0 0.0
    %912 = vmatprep.subr.mxu0 0.0
    %913 = vmatpush1.msra.mxu0 0.0
    %914 = vmatprep.subr.mxu0 0.0
    %915 = vmatpush1.msra.mxu0 0.0
    %916 = vmatprep.subr.mxu0 0.0
    %917 = vmatpush1.msra.mxu0 0.0
    %918 = vmatprep.subr.mxu0 0.0
    %919 = vmatpush1.msra.mxu0 0.0
    %920 = vmatprep.subr.mxu0 0.0
    %921 = vmatpush1.msra.mxu0 0.0
    %922 = vmatprep.subr.mxu0 0.0
    %923 = vmatpush1.msra.mxu0 0.0
    %924 = vmatprep.subr.mxu0 0.0
    %925 = vmatpush1.msra.mxu0 0.0
    %926 = vmatprep.subr.mxu0 0.0
    %927 = vmatpush1.msra.mxu0 0.0
    %928 = vmatprep.subr.mxu0 0.0
    %929 = vmatpush1.msra.mxu0 0.0
    %930 = vmatprep.subr.mxu0 0.0
    %931 = vmatpush1.msra.mxu0 0.0
    %932 = vmatprep.subr.mxu0 0.0
    %933 = vmatpush1.msra.mxu0 0.0
    %934 = vmatprep.subr.mxu0 0.0
    %935 = vmatpush1.msra.mxu0 0.0
    %936 = vmatprep.subr.mxu0 0.0
    %937 = vmatpush1.msra.mxu0 0.0
    %938 = vmatprep.subr.mxu0 0.0
    %939 = vmatpush1.msra.mxu0 0.0
    %940 = vmatprep.subr.mxu0 0.0
    %941 = vmatpush1.msra.mxu0 0.0
    %942 = vmatprep.mubr.f32.mxu0 0.0
    %943 = vmatmul.mubr.f32.gmra.mrb[0].mxu0 %v876
    %v944 = vpop.f32.mrb[0].mxu0
    %v945 = vadd.f32 %v75, %v944
    %v946 = vpop.f32.mrb[0].mxu0
    %947 = vdwg.mxu0
    %v948 = vtanh.pop %v945
    %949 = vst.msk [vmem:[#allocation2 + $0x4] sm:$0x3] %vm798, %v948
    %v951 = vsel %vm174, %v948, 0
    %953 = vmatprep.subr.mxu0 0.0
    %954 = vmatpush1.msra.mxu0 %v66
    %955 = vmatprep.subr.mxu0 0.0
    %956 = vmatpush1.msra.mxu0 %v67
    %957 = vmatprep.subr.mxu0 0.0
    %958 = vmatpush1.msra.mxu0 %v68
    %959 = vmatprep.subr.mxu0 0.0
    %960 = vmatpush1.msra.mxu0 %v69
    %961 = vmatprep.subr.mxu0 0.0
    %962 = vmatpush1.msra.mxu0 0.0
    %963 = vmatprep.subr.mxu0 0.0
    %964 = vmatpush1.msra.mxu0 0.0
    %965 = vmatprep.subr.mxu0 0.0
    %966 = vmatpush1.msra.mxu0 0.0
    %967 = vmatprep.subr.mxu0 0.0
    %968 = vmatpush1.msra.mxu0 0.0
    %969 = vmatprep.subr.mxu0 0.0
    %970 = vmatpush1.msra.mxu0 0.0
    %971 = vmatprep.subr.mxu0 0.0
    %972 = vmatpush1.msra.mxu0 0.0
    %973 = vmatprep.subr.mxu0 0.0
    %974 = vmatpush1.msra.mxu0 0.0
    %975 = vmatprep.subr.mxu0 0.0
    %976 = vmatpush1.msra.mxu0 0.0
    %977 = vmatprep.subr.mxu0 0.0
    %978 = vmatpush1.msra.mxu0 0.0
    %979 = vmatprep.subr.mxu0 0.0
    %980 = vmatpush1.msra.mxu0 0.0
    %981 = vmatprep.subr.mxu0 0.0
    %982 = vmatpush1.msra.mxu0 0.0
    %983 = vmatprep.subr.mxu0 0.0
    %984 = vmatpush1.msra.mxu0 0.0
    %985 = vmatprep.subr.mxu0 0.0
    %986 = vmatpush1.msra.mxu0 0.0
    %987 = vmatprep.subr.mxu0 0.0
    %988 = vmatpush1.msra.mxu0 0.0
    %989 = vmatprep.subr.mxu0 0.0
    %990 = vmatpush1.msra.mxu0 0.0
    %991 = vmatprep.subr.mxu0 0.0
    %992 = vmatpush1.msra.mxu0 0.0
    %993 = vmatprep.subr.mxu0 0.0
    %994 = vmatpush1.msra.mxu0 0.0
    %995 = vmatprep.subr.mxu0 0.0
    %996 = vmatpush1.msra.mxu0 0.0
    %997 = vmatprep.subr.mxu0 0.0
    %998 = vmatpush1.msra.mxu0 0.0
    %999 = vmatprep.subr.mxu0 0.0
    %1000 = vmatpush1.msra.mxu0 0.0
    %1001 = vmatprep.subr.mxu0 0.0
    %1002 = vmatpush1.msra.mxu0 0.0
    %1003 = vmatprep.subr.mxu0 0.0
    %1004 = vmatpush1.msra.mxu0 0.0
    %1005 = vmatprep.subr.mxu0 0.0
    %1006 = vmatpush1.msra.mxu0 0.0
    %1007 = vmatprep.subr.mxu0 0.0
    %1008 = vmatpush1.msra.mxu0 0.0
    %1009 = vmatprep.subr.mxu0 0.0
    %1010 = vmatpush1.msra.mxu0 0.0
    %1011 = vmatprep.subr.mxu0 0.0
    %1012 = vmatpush1.msra.mxu0 0.0
    %1013 = vmatprep.subr.mxu0 0.0
    %1014 = vmatpush1.msra.mxu0 0.0
    %1015 = vmatprep.subr.mxu0 0.0
    %1016 = vmatpush1.msra.mxu0 0.0
    %1017 = vmatprep.mubr.f32.mxu0 0.0
    %1018 = vmatmul.mubr.f32.gmra.mrb[0].mxu0 %v951
    %v1019 = vpop.f32.mrb[0].mxu0
    %v1020 = vadd.f32 %v75, %v1019
    %v1021 = vpop.f32.mrb[0].mxu0
    %1022 = vdwg.mxu0
    %v1023 = vtanh.pop %v1020
    %1024 = vst.msk [vmem:[#allocation2 + $0x6] sm:$0x3] %vm798, %v1023
    %v1026 = vsel %vm174, %v1023, 0
    %1028 = vmatprep.subr.mxu0 0.0
    %1029 = vmatpush1.msra.mxu0 %v66
    %1030 = vmatprep.subr.mxu0 0.0
    %1031 = vmatpush1.msra.mxu0 %v67
    %1032 = vmatprep.subr.mxu0 0.0
    %1033 = vmatpush1.msra.mxu0 %v68
    %1034 = vmatprep.subr.mxu0 0.0
    %1035 = vmatpush1.msra.mxu0 %v69
    %1036 = vmatprep.subr.mxu0 0.0
    %1037 = vmatpush1.msra.mxu0 0.0
    %1038 = vmatprep.subr.mxu0 0.0
    %1039 = vmatpush1.msra.mxu0 0.0
    %1040 = vmatprep.subr.mxu0 0.0
    %1041 = vmatpush1.msra.mxu0 0.0
    %1042 = vmatprep.subr.mxu0 0.0
    %1043 = vmatpush1.msra.mxu0 0.0
    %1044 = vmatprep.subr.mxu0 0.0
    %1045 = vmatpush1.msra.mxu0 0.0
    %1046 = vmatprep.subr.mxu0 0.0
    %1047 = vmatpush1.msra.mxu0 0.0
    %1048 = vmatprep.subr.mxu0 0.0
    %1049 = vmatpush1.msra.mxu0 0.0
    %1050 = vmatprep.subr.mxu0 0.0
    %1051 = vmatpush1.msra.mxu0 0.0
    %1052 = vmatprep.subr.mxu0 0.0
    %1053 = vmatpush1.msra.mxu0 0.0
    %1054 = vmatprep.subr.mxu0 0.0
    %1055 = vmatpush1.msra.mxu0 0.0
    %1056 = vmatprep.subr.mxu0 0.0
    %1057 = vmatpush1.msra.mxu0 0.0
    %1058 = vmatprep.subr.mxu0 0.0
    %1059 = vmatpush1.msra.mxu0 0.0
    %1060 = vmatprep.subr.mxu0 0.0
    %1061 = vmatpush1.msra.mxu0 0.0
    %1062 = vmatprep.subr.mxu0 0.0
    %1063 = vmatpush1.msra.mxu0 0.0
    %1064 = vmatprep.subr.mxu0 0.0
    %1065 = vmatpush1.msra.mxu0 0.0
    %1066 = vmatprep.subr.mxu0 0.0
    %1067 = vmatpush1.msra.mxu0 0.0
    %1068 = vmatprep.subr.mxu0 0.0
    %1069 = vmatpush1.msra.mxu0 0.0
    %1070 = vmatprep.subr.mxu0 0.0
    %1071 = vmatpush1.msra.mxu0 0.0
    %1072 = vmatprep.subr.mxu0 0.0
    %1073 = vmatpush1.msra.mxu0 0.0
    %1074 = vmatprep.subr.mxu0 0.0
    %1075 = vmatpush1.msra.mxu0 0.0
    %1076 = vmatprep.subr.mxu0 0.0
    %1077 = vmatpush1.msra.mxu0 0.0
    %1078 = vmatprep.subr.mxu0 0.0
    %1079 = vmatpush1.msra.mxu0 0.0
    %1080 = vmatprep.subr.mxu0 0.0
    %1081 = vmatpush1.msra.mxu0 0.0
    %1082 = vmatprep.subr.mxu0 0.0
    %1083 = vmatpush1.msra.mxu0 0.0
    %1084 = vmatprep.subr.mxu0 0.0
    %1085 = vmatpush1.msra.mxu0 0.0
    %1086 = vmatprep.subr.mxu0 0.0
    %1087 = vmatpush1.msra.mxu0 0.0
    %1088 = vmatprep.subr.mxu0 0.0
    %1089 = vmatpush1.msra.mxu0 0.0
    %1090 = vmatprep.subr.mxu0 0.0
    %1091 = vmatpush1.msra.mxu0 0.0
    %1092 = vmatprep.mubr.f32.mxu0 0.0
    %1093 = vmatmul.mubr.f32.gmra.mrb[0].mxu0 %v1026
    %v1094 = vpop.f32.mrb[0].mxu0
    %v1095 = vadd.f32 %v75, %v1094
    %v1096 = vpop.f32.mrb[0].mxu0
    %1097 = vdwg.mxu0
    %v1098 = vtanh.pop %v1095
    %1099 = vst.msk [vmem:[#allocation2 + $0x8] sm:$0x3] %vm798, %v1098
    %v1101 = vsel %vm174, %v1098, 0
    %1103 = vmatprep.subr.mxu0 0.0
    %1104 = vmatpush1.msra.mxu0 %v66
    %1105 = vmatprep.subr.mxu0 0.0
    %1106 = vmatpush1.msra.mxu0 %v67
    %1107 = vmatprep.subr.mxu0 0.0
    %1108 = vmatpush1.msra.mxu0 %v68
    %1109 = vmatprep.subr.mxu0 0.0
    %1110 = vmatpush1.msra.mxu0 %v69
    %1111 = vmatprep.subr.mxu0 0.0
    %1112 = vmatpush1.msra.mxu0 0.0
    %1113 = vmatprep.subr.mxu0 0.0
    %1114 = vmatpush1.msra.mxu0 0.0
    %1115 = vmatprep.subr.mxu0 0.0
    %1116 = vmatpush1.msra.mxu0 0.0
    %1117 = vmatprep.subr.mxu0 0.0
    %1118 = vmatpush1.msra.mxu0 0.0
    %1119 = vmatprep.subr.mxu0 0.0
    %1120 = vmatpush1.msra.mxu0 0.0
    %1121 = vmatprep.subr.mxu0 0.0
    %1122 = vmatpush1.msra.mxu0 0.0
    %1123 = vmatprep.subr.mxu0 0.0
    %1124 = vmatpush1.msra.mxu0 0.0
    %1125 = vmatprep.subr.mxu0 0.0
    %1126 = vmatpush1.msra.mxu0 0.0
    %1127 = vmatprep.subr.mxu0 0.0
    %1128 = vmatpush1.msra.mxu0 0.0
    %1129 = vmatprep.subr.mxu0 0.0
    %1130 = vmatpush1.msra.mxu0 0.0
    %1131 = vmatprep.subr.mxu0 0.0
    %1132 = vmatpush1.msra.mxu0 0.0
    %1133 = vmatprep.subr.mxu0 0.0
    %1134 = vmatpush1.msra.mxu0 0.0
    %1135 = vmatprep.subr.mxu0 0.0
    %1136 = vmatpush1.msra.mxu0 0.0
    %1137 = vmatprep.subr.mxu0 0.0
    %1138 = vmatpush1.msra.mxu0 0.0
    %1139 = vmatprep.subr.mxu0 0.0
    %1140 = vmatpush1.msra.mxu0 0.0
    %1141 = vmatprep.subr.mxu0 0.0
    %1142 = vmatpush1.msra.mxu0 0.0
    %1143 = vmatprep.subr.mxu0 0.0
    %1144 = vmatpush1.msra.mxu0 0.0
    %1145 = vmatprep.subr.mxu0 0.0
    %1146 = vmatpush1.msra.mxu0 0.0
    %1147 = vmatprep.subr.mxu0 0.0
    %1148 = vmatpush1.msra.mxu0 0.0
    %1149 = vmatprep.subr.mxu0 0.0
    %1150 = vmatpush1.msra.mxu0 0.0
    %1151 = vmatprep.subr.mxu0 0.0
    %1152 = vmatpush1.msra.mxu0 0.0
    %1153 = vmatprep.subr.mxu0 0.0
    %1154 = vmatpush1.msra.mxu0 0.0
    %1155 = vmatprep.subr.mxu0 0.0
    %1156 = vmatpush1.msra.mxu0 0.0
    %1157 = vmatprep.subr.mxu0 0.0
    %1158 = vmatpush1.msra.mxu0 0.0
    %1159 = vmatprep.subr.mxu0 0.0
    %1160 = vmatpush1.msra.mxu0 0.0
    %1161 = vmatprep.subr.mxu0 0.0
    %1162 = vmatpush1.msra.mxu0 0.0
    %1163 = vmatprep.subr.mxu0 0.0
    %1164 = vmatpush1.msra.mxu0 0.0
    %1165 = vmatprep.subr.mxu0 0.0
    %1166 = vmatpush1.msra.mxu0 0.0
    %1167 = vmatprep.mubr.f32.mxu0 0.0
    %1168 = vmatmul.mubr.f32.gmra.mrb[0].mxu0 %v1101
    %v1169 = vpop.f32.mrb[0].mxu0
    %v1170 = vadd.f32 %v75, %v1169
    %v1171 = vpop.f32.mrb[0].mxu0
    %1172 = vdwg.mxu0
    %v1173 = vtanh.pop %v1170
    %1174 = vst.msk [vmem:[#allocation2 + $0xa] sm:$0x3] %vm798, %v1173
    %v1175 = vld [vmem:[#allocation2] sm:$0xff]
    %v1176 = vld [vmem:[#allocation2 + $0x8] sm:$0xf]
    %v1177 = vld [vmem:[%s7] sm:$0xff]
    %v1178 = vld [vmem:[%s7 + $0x8] sm:$0xff]
    %v1179 = vld [vmem:[%s7 + $0x10] sm:$0xff]
    %v1180 = vld [vmem:[%s7 + $0x18] sm:$0xff]
    %v1181 = vld [vmem:[%s8] sm:$0x1]
    %v1183 = vlaneseq
    %v1184 = vshrl.u32 %v1183, 7
    %v1185 = vsub.s32 0, %v1184
    %v1186 = vrot.slane %v1181, %v1185
    %v1189 = vsel %vm174, %v1175, 0
    %v1192 = vsel %vm174, %v1176, 0
    %1194 = vmatprep.subr.mxu0 0.0
    %1195 = vmatpush1.msra.mxu0 %v1177
    %1196 = vmatprep.subr.mxu0 0.0
    %1197 = vmatpush1.msra.mxu0 %v1178
    %1198 = vmatprep.subr.mxu0 0.0
    %1199 = vmatpush1.msra.mxu0 %v1179
    %1200 = vmatprep.subr.mxu0 0.0
    %1201 = vmatpush1.msra.mxu0 %v1180
    %1202 = vmatprep.subr.mxu0 0.0
    %1203 = vmatpush1.msra.mxu0 0.0
    %1204 = vmatprep.subr.mxu0 0.0
    %1205 = vmatpush1.msra.mxu0 0.0
    %1206 = vmatprep.subr.mxu0 0.0
    %1207 = vmatpush1.msra.mxu0 0.0
    %1208 = vmatprep.subr.mxu0 0.0
    %1209 = vmatpush1.msra.mxu0 0.0
    %1210 = vmatprep.subr.mxu0 0.0
    %1211 = vmatpush1.msra.mxu0 0.0
    %1212 = vmatprep.subr.mxu0 0.0
    %1213 = vmatpush1.msra.mxu0 0.0
    %1214 = vmatprep.subr.mxu0 0.0
    %1215 = vmatpush1.msra.mxu0 0.0
    %1216 = vmatprep.subr.mxu0 0.0
    %1217 = vmatpush1.msra.mxu0 0.0
    %1218 = vmatprep.subr.mxu0 0.0
    %1219 = vmatpush1.msra.mxu0 0.0
    %1220 = vmatprep.subr.mxu0 0.0
    %1221 = vmatpush1.msra.mxu0 0.0
    %1222 = vmatprep.subr.mxu0 0.0
    %1223 = vmatpush1.msra.mxu0 0.0
    %1224 = vmatprep.subr.mxu0 0.0
    %1225 = vmatpush1.msra.mxu0 0.0
    %1226 = vmatprep.subr.mxu0 0.0
    %1227 = vmatpush1.msra.mxu0 0.0
    %1228 = vmatprep.subr.mxu0 0.0
    %1229 = vmatpush1.msra.mxu0 0.0
    %1230 = vmatprep.subr.mxu0 0.0
    %1231 = vmatpush1.msra.mxu0 0.0
    %1232 = vmatprep.subr.mxu0 0.0
    %1233 = vmatpush1.msra.mxu0 0.0
    %1234 = vmatprep.subr.mxu0 0.0
    %1235 = vmatpush1.msra.mxu0 0.0
    %1236 = vmatprep.subr.mxu0 0.0
    %1237 = vmatpush1.msra.mxu0 0.0
    %1238 = vmatprep.subr.mxu0 0.0
    %1239 = vmatpush1.msra.mxu0 0.0
    %1240 = vmatprep.subr.mxu0 0.0
    %1241 = vmatpush1.msra.mxu0 0.0
    %1242 = vmatprep.subr.mxu0 0.0
    %1243 = vmatpush1.msra.mxu0 0.0
    %1244 = vmatprep.subr.mxu0 0.0
    %1245 = vmatpush1.msra.mxu0 0.0
    %1246 = vmatprep.subr.mxu0 0.0
    %1247 = vmatpush1.msra.mxu0 0.0
    %1248 = vmatprep.subr.mxu0 0.0
    %1249 = vmatpush1.msra.mxu0 0.0
    %1250 = vmatprep.subr.mxu0 0.0
    %1251 = vmatpush1.msra.mxu0 0.0
    %1252 = vmatprep.subr.mxu0 0.0
    %1253 = vmatpush1.msra.mxu0 0.0
    %1254 = vmatprep.subr.mxu0 0.0
    %1255 = vmatpush1.msra.mxu0 0.0
    %1256 = vmatprep.subr.mxu0 0.0
    %1257 = vmatpush1.msra.mxu0 0.0
    %1258 = vmatprep.mubr.f32.mxu0 0.0
    %1259 = vmatmul.mubr.f32.gmra.mrb[0].mxu0 %v1189
    %v1260 = vpop.f32.mrb[0].mxu0
    %v1261 = vadd.f32 %v1186, %v1260
    %v1262 = vpop.f32.mrb[0].mxu0
    %1263 = vmatprep.mubr.f32.mxu0 0.0
    %1264 = vmatmul.mubr.f32.gmra.mrb[0].mxu0 %v1192
    %v1265 = vpop.f32.mrb[0].mxu0
    %v1266 = vadd.f32 %v1186, %v1265
    %v1267 = vpop.f32.mrb[0].mxu0
    %1268 = vdwg.mxu0
    %1269 = vst.msk [vmem:[%s9] sm:$0xff] %vm87, %v1261
    %vm1270 = vcmask 27648
    %1271 = vst.msk [vmem:[%s9 + $0x8] sm:$0xf] %vm1270, %v1266
    // Predicated region
    $region46: #{tpu_custom_call.1} parent=1 // pred_check
      _
    $region47: #{tpu_custom_call.1} parent=1 // pred_check_branch
      %1273 = sbr.rel (0) target = $region49
    $region48: #{tpu_custom_call.1} parent=1 // pred_region
      _
    $region49: #{tpu_custom_call.1} parent=1 // pred_fallthru
      _
    // Predicated region
    $region50: #{tpu_custom_call.1} parent=1 // pred_check
      _
    $region51: #{tpu_custom_call.1} parent=1 // pred_check_branch
      %1275 = sbr.rel (0) target = $region53
    $region52: #{tpu_custom_call.1} parent=1 // pred_region
      _
    $region53: #{tpu_custom_call.1} parent=1 // pred_fallthru
      _
    %1276 = vsyncpa [#allocation4], 1
    %1277 = vsyncpa [#allocation6], 1

</llo_original>
